<compile_context>
chip_gen: v6e
topology: v6e:2x2x1
jax: 0.10.0
libtpu: 0.0.40
codegen_flags: <defaults>
</compile_context>

<pallas_src>
import functools

import jax
import jax.numpy as jnp
from jax.experimental import pallas as pl
from jax.experimental.pallas import tpu as pltpu

BN_EPS = 1e-5
LANE = 128
SUBLANE = 8


def _round_up(n, m):
    return ((n + m - 1) // m) * m


def _sigmoid(x):
    # exp -> EUP; approx reciprocal -> EUP. Keeps the f32 divide off the VPU.
    return pl.reciprocal(1.0 + jnp.exp(-x), approx=True)


def _bn_sigmoid(h, gamma, beta, n_valid, row_mask):
    # Single-pass training-mode BatchNorm1d (biased variance, eps=1e-5):
    # var = E[h^2] - E[h]^2, with gamma*rsqrt folded into one scale so the
    # normalize is a single fused multiply-add per element; then sigmoid.
    hm = h if row_mask is None else jnp.where(row_mask, h, 0.0)
    inv_n = 1.0 / float(n_valid)
    mean = jnp.sum(hm, axis=0, keepdims=True) * inv_n
    ex2 = jnp.sum(hm * hm, axis=0, keepdims=True) * inv_n
    var = ex2 - mean * mean
    scale = gamma * jax.lax.rsqrt(var + BN_EPS)
    shift = beta - mean * scale
    return _sigmoid(h * scale + shift)


def mlp_kernel(
    x_ref,
    w1_ref, g1_ref, be1_ref,
    w2_ref, g2_ref, be2_ref,
    w3_ref, g3_ref, be3_ref,
    w4_ref, b4_ref,
    o_ref,
    *, n_valid, batch_is_padded,
):
    x = x_ref[...]  # bf16, lane-dense padded features

    row_mask = None
    if batch_is_padded:
        rows = jax.lax.broadcasted_iota(jnp.int32, (x.shape[0], 1), 0)
        row_mask = rows < n_valid

    # Layer 1: Linear (bf16 MXU, f32 accumulate) -> BN -> Sigmoid (f32).
    # Linear bias is omitted: BN's mean subtraction cancels it exactly.
    h = jnp.dot(x, w1_ref[...], preferred_element_type=jnp.float32)
    h = _bn_sigmoid(h, g1_ref[...], be1_ref[...], n_valid, row_mask)

    # Layer 2.
    h = jnp.dot(h.astype(jnp.bfloat16), w2_ref[...],
                preferred_element_type=jnp.float32)
    h = _bn_sigmoid(h, g2_ref[...], be2_ref[...], n_valid, row_mask)

    # Layer 3.
    h = jnp.dot(h.astype(jnp.bfloat16), w3_ref[...],
                preferred_element_type=jnp.float32)
    h = _bn_sigmoid(h, g3_ref[...], be3_ref[...], n_valid, row_mask)

    # Output layer: Linear (+bias) -> Sigmoid (written lane-dense, sliced
    # outside the kernel).
    out = jnp.dot(h.astype(jnp.bfloat16), w4_ref[...],
                  preferred_element_type=jnp.float32) + b4_ref[...]
    o_ref[...] = _sigmoid(out).astype(o_ref.dtype)


def prepare_params(params, input_size, hidden_size, output_size):
    """One-time conversion: transpose to (in, out), pad feature dims to 128
    lanes, cast weights to bf16. Done outside the hot path. The hidden-layer
    Linear biases are intentionally not materialized (BN cancels them)."""
    in_p = _round_up(input_size, LANE)
    hid_p = _round_up(hidden_size, LANE)
    out_p = _round_up(output_size, LANE)

    def pad2(a, r, c):
        return jnp.pad(a, ((0, r - a.shape[0]), (0, c - a.shape[1])))

    def pad_row(v, c):
        return jnp.pad(v, (0, c - v.shape[0]))[None, :].astype(jnp.float32)

    prepped = {
        "w1": pad2(params["w1"].T, in_p, hid_p).astype(jnp.bfloat16),
        "g1": pad_row(params["g1"], hid_p),
        "be1": pad_row(params["be1"], hid_p),
        "w2": pad2(params["w2"].T, hid_p, hid_p).astype(jnp.bfloat16),
        "g2": pad_row(params["g2"], hid_p),
        "be2": pad_row(params["be2"], hid_p),
        "w3": pad2(params["w3"].T, hid_p, hid_p).astype(jnp.bfloat16),
        "g3": pad_row(params["g3"], hid_p),
        "be3": pad_row(params["be3"], hid_p),
        "w4": pad2(params["w4"].T, hid_p, out_p).astype(jnp.bfloat16),
        "b4": pad_row(params["b4"], out_p),
    }
    meta = {
        "input_size": input_size, "hidden_size": hidden_size,
        "output_size": output_size,
        "in_p": in_p, "hid_p": hid_p, "out_p": out_p,
    }
    return prepped, meta


def two_layer_net_forward(x, prepped, meta):
    """x: (batch, input_size) float32."""
    batch = x.shape[0]
    b_p = _round_up(batch, SUBLANE)
    in_p, hid_p, out_p = meta["in_p"], meta["hid_p"], meta["out_p"]

    xp = jnp.pad(
        x, ((0, b_p - batch), (0, in_p - x.shape[1]))
    ).astype(jnp.bfloat16)

    args = (
        xp,
        prepped["w1"], prepped["g1"], prepped["be1"],
        prepped["w2"], prepped["g2"], prepped["be2"],
        prepped["w3"], prepped["g3"], prepped["be3"],
        prepped["w4"], prepped["b4"],
    )

    flops = 2 * b_p * (in_p * hid_p + 2 * hid_p * hid_p + hid_p * out_p)
    transcendentals = b_p * (3 * hid_p + out_p) * 2 + 3 * hid_p  # exp+rcp, rsqrt
    bytes_accessed = (
        sum(int(a.size) * a.dtype.itemsize for a in args) + b_p * out_p * 4
    )

    vmem = pl.BlockSpec(memory_space=pltpu.MemorySpace.VMEM)
    kernel = functools.partial(
        mlp_kernel, n_valid=batch, batch_is_padded=(b_p != batch)
    )

    out_padded = pl.pallas_call(
        kernel,
        out_shape=jax.ShapeDtypeStruct((b_p, out_p), jnp.float32),
        in_specs=[vmem] * len(args),
        out_specs=vmem,
        cost_estimate=pl.CostEstimate(
            flops=flops,
            transcendentals=transcendentals,
            bytes_accessed=bytes_accessed,
        ),
    )(*args)

    return out_padded[:batch, : meta["output_size"]]


def init_params(key, input_size, hidden_size, output_size):
    """Deterministic synthetic init (PyTorch-like uniform fan-in scaling),
    stored in PyTorch layout: wN (out, in), bN/gN/beN (features,)."""
    ks = jax.random.split(key, 8)

    def linear(kw, kb, fan_in, fan_out):
        bound = 1.0 / jnp.sqrt(fan_in)
        w = jax.random.uniform(kw, (fan_out, fan_in), jnp.float32, -bound, bound)
        b = jax.random.uniform(kb, (fan_out,), jnp.float32, -bound, bound)
        return w, b

    w1, b1 = linear(ks[0], ks[1], input_size, hidden_size)
    w2, b2 = linear(ks[2], ks[3], hidden_size, hidden_size)
    w3, b3 = linear(ks[4], ks[5], hidden_size, hidden_size)
    w4, b4 = linear(ks[6], ks[7], hidden_size, output_size)

    ones = jnp.ones((hidden_size,), jnp.float32)
    zeros = jnp.zeros((hidden_size,), jnp.float32)
    return {
        "w1": w1, "b1": b1, "g1": ones, "be1": zeros,
        "w2": w2, "b2": b2, "g2": ones, "be2": zeros,
        "w3": w3, "b3": b3, "g3": ones, "be3": zeros,
        "w4": w4, "b4": b4,
    }


def reference_forward(x, params):
    """Pure-JAX f32 reference mirroring the PyTorch forward exactly
    (training-mode BN, Linear biases included)."""
    def bn(h, g, b):
        m = jnp.mean(h, axis=0, keepdims=True)
        v = jnp.mean((h - m) ** 2, axis=0, keepdims=True)
        return g * (h - m) / jnp.sqrt(v + BN_EPS) + b

    h = jax.nn.sigmoid(bn(x @ params["w1"].T + params["b1"], params["g1"], params["be1"]))
    h = jax.nn.sigmoid(bn(h @ params["w2"].T + params["b2"], params["g2"], params["be2"]))
    h = jax.nn.sigmoid(bn(h @ params["w3"].T + params["b3"], params["g3"], params["be3"]))
    return jax.nn.sigmoid(h @ params["w4"].T + params["b4"])


if __name__ == "__main__":
    batch, input_size, hidden_size, output_size = 8, 16, 32, 4

    key = jax.random.PRNGKey(0)
    k_x, k_p = jax.random.split(key)
    x = jax.random.normal(k_x, (batch, input_size), jnp.float32)
    params = init_params(k_p, input_size, hidden_size, output_size)

    prepped, meta = prepare_params(params, input_size, hidden_size, output_size)

    out = two_layer_net_forward(x, prepped, meta)
    out = jax.block_until_ready(out)

    ref = reference_forward(x, params)
    assert out.shape == (batch, output_size)
    # bf16 MXU operands + approx-reciprocal sigmoid vs f32 reference → looser tol.
    assert jnp.allclose(out, ref, atol=3e-2, rtol=3e-2), "mismatch vs JAX reference"

    print("KERNEL_OK")
</pallas_src>

<mosaic_0001>
module attributes {stable_mosaic.version = 11 : i64} {
  func.func @mlp_kernel(%arg0: memref<8x128xbf16, #tpu.memory_space<vmem>>, %arg1: memref<128x128xbf16, #tpu.memory_space<vmem>>, %arg2: memref<1x128xf32, #tpu.memory_space<vmem>>, %arg3: memref<1x128xf32, #tpu.memory_space<vmem>>, %arg4: memref<128x128xbf16, #tpu.memory_space<vmem>>, %arg5: memref<1x128xf32, #tpu.memory_space<vmem>>, %arg6: memref<1x128xf32, #tpu.memory_space<vmem>>, %arg7: memref<128x128xbf16, #tpu.memory_space<vmem>>, %arg8: memref<1x128xf32, #tpu.memory_space<vmem>>, %arg9: memref<1x128xf32, #tpu.memory_space<vmem>>, %arg10: memref<128x128xbf16, #tpu.memory_space<vmem>>, %arg11: memref<1x128xf32, #tpu.memory_space<vmem>>, %arg12: memref<8x128xf32, #tpu.memory_space<vmem>>) attributes {dimension_semantics = [], scalar_prefetch = 0 : i64, scratch_operands = 0 : i64, tpu.core_type = #tpu.core_type<tc>} {
    %c0 = arith.constant 0 : index
    %c0_0 = arith.constant 0 : index
    %0 = vector.load %arg0[%c0, %c0_0] : memref<8x128xbf16, #tpu.memory_space<vmem>>, vector<8x128xbf16>
    %c0_1 = arith.constant 0 : index
    %c0_2 = arith.constant 0 : index
    %1 = vector.load %arg1[%c0_1, %c0_2] : memref<128x128xbf16, #tpu.memory_space<vmem>>, vector<128x128xbf16>
    %cst = arith.constant dense<0.000000e+00> : vector<8x128xf32>
    %2 = tpu.matmul %0, %1, %cst {dimension_numbers = #tpu.dot_dimension_numbers<[1], [0], [0], [1], [0, 0, 1, 1], [], []>} : vector<8x128xbf16>, vector<128x128xbf16>, vector<8x128xf32> -> vector<8x128xf32>
    %c0_3 = arith.constant 0 : index
    %c0_4 = arith.constant 0 : index
    %3 = vector.load %arg2[%c0_3, %c0_4] : memref<1x128xf32, #tpu.memory_space<vmem>>, vector<1x128xf32>
    %c0_5 = arith.constant 0 : index
    %c0_6 = arith.constant 0 : index
    %4 = vector.load %arg3[%c0_5, %c0_6] : memref<1x128xf32, #tpu.memory_space<vmem>>, vector<1x128xf32>
    %cst_7 = arith.constant dense<0.000000e+00> : vector<128xf32>
    %5 = vector.multi_reduction <add>, %2, %cst_7 [0] : vector<8x128xf32> to vector<128xf32>
    %6 = vector.shape_cast %5 : vector<128xf32> to vector<1x128xf32>
    %cst_8 = arith.constant 1.250000e-01 : f32
    %7 = vector.broadcast %cst_8 : f32 to vector<1x128xf32>
    %8 = arith.mulf %6, %7 : vector<1x128xf32>
    %9 = arith.mulf %2, %2 : vector<8x128xf32>
    %cst_9 = arith.constant dense<0.000000e+00> : vector<128xf32>
    %10 = vector.multi_reduction <add>, %9, %cst_9 [0] : vector<8x128xf32> to vector<128xf32>
    %11 = vector.shape_cast %10 : vector<128xf32> to vector<1x128xf32>
    %cst_10 = arith.constant 1.250000e-01 : f32
    %12 = vector.broadcast %cst_10 : f32 to vector<1x128xf32>
    %13 = arith.mulf %11, %12 : vector<1x128xf32>
    %14 = arith.mulf %8, %8 : vector<1x128xf32>
    %15 = arith.subf %13, %14 : vector<1x128xf32>
    %cst_11 = arith.constant 9.99999974E-6 : f32
    %16 = vector.broadcast %cst_11 : f32 to vector<1x128xf32>
    %17 = arith.addf %15, %16 : vector<1x128xf32>
    %18 = math.rsqrt %17 : vector<1x128xf32>
    %19 = arith.mulf %3, %18 : vector<1x128xf32>
    %20 = arith.mulf %8, %19 : vector<1x128xf32>
    %21 = arith.subf %4, %20 : vector<1x128xf32>
    %22 = vector.broadcast %19 : vector<1x128xf32> to vector<8x128xf32>
    %23 = arith.mulf %2, %22 : vector<8x128xf32>
    %24 = vector.broadcast %21 : vector<1x128xf32> to vector<8x128xf32>
    %25 = arith.addf %23, %24 : vector<8x128xf32>
    %cst_12 = arith.constant 0.000000e+00 : f32
    %26 = vector.broadcast %cst_12 : f32 to vector<8x128xf32>
    %27 = arith.subf %26, %25 : vector<8x128xf32>
    %28 = math.exp %27 : vector<8x128xf32>
    %cst_13 = arith.constant 1.000000e+00 : f32
    %29 = vector.broadcast %cst_13 : f32 to vector<8x128xf32>
    %30 = arith.addf %29, %28 : vector<8x128xf32>
    %31 = tpu.reciprocal %30 {approx = true} : vector<8x128xf32> -> vector<8x128xf32>
    %32 = arith.truncf %31 : vector<8x128xf32> to vector<8x128xbf16>
    %c0_14 = arith.constant 0 : index
    %c0_15 = arith.constant 0 : index
    %33 = vector.load %arg4[%c0_14, %c0_15] : memref<128x128xbf16, #tpu.memory_space<vmem>>, vector<128x128xbf16>
    %cst_16 = arith.constant dense<0.000000e+00> : vector<8x128xf32>
    %34 = tpu.matmul %32, %33, %cst_16 {dimension_numbers = #tpu.dot_dimension_numbers<[1], [0], [0], [1], [0, 0, 1, 1], [], []>} : vector<8x128xbf16>, vector<128x128xbf16>, vector<8x128xf32> -> vector<8x128xf32>
    %c0_17 = arith.constant 0 : index
    %c0_18 = arith.constant 0 : index
    %35 = vector.load %arg5[%c0_17, %c0_18] : memref<1x128xf32, #tpu.memory_space<vmem>>, vector<1x128xf32>
    %c0_19 = arith.constant 0 : index
    %c0_20 = arith.constant 0 : index
    %36 = vector.load %arg6[%c0_19, %c0_20] : memref<1x128xf32, #tpu.memory_space<vmem>>, vector<1x128xf32>
    %cst_21 = arith.constant dense<0.000000e+00> : vector<128xf32>
    %37 = vector.multi_reduction <add>, %34, %cst_21 [0] : vector<8x128xf32> to vector<128xf32>
    %38 = vector.shape_cast %37 : vector<128xf32> to vector<1x128xf32>
    %cst_22 = arith.constant 1.250000e-01 : f32
    %39 = vector.broadcast %cst_22 : f32 to vector<1x128xf32>
    %40 = arith.mulf %38, %39 : vector<1x128xf32>
    %41 = arith.mulf %34, %34 : vector<8x128xf32>
    %cst_23 = arith.constant dense<0.000000e+00> : vector<128xf32>
    %42 = vector.multi_reduction <add>, %41, %cst_23 [0] : vector<8x128xf32> to vector<128xf32>
    %43 = vector.shape_cast %42 : vector<128xf32> to vector<1x128xf32>
    %cst_24 = arith.constant 1.250000e-01 : f32
    %44 = vector.broadcast %cst_24 : f32 to vector<1x128xf32>
    %45 = arith.mulf %43, %44 : vector<1x128xf32>
    %46 = arith.mulf %40, %40 : vector<1x128xf32>
    %47 = arith.subf %45, %46 : vector<1x128xf32>
    %cst_25 = arith.constant 9.99999974E-6 : f32
    %48 = vector.broadcast %cst_25 : f32 to vector<1x128xf32>
    %49 = arith.addf %47, %48 : vector<1x128xf32>
    %50 = math.rsqrt %49 : vector<1x128xf32>
    %51 = arith.mulf %35, %50 : vector<1x128xf32>
    %52 = arith.mulf %40, %51 : vector<1x128xf32>
    %53 = arith.subf %36, %52 : vector<1x128xf32>
    %54 = vector.broadcast %51 : vector<1x128xf32> to vector<8x128xf32>
    %55 = arith.mulf %34, %54 : vector<8x128xf32>
    %56 = vector.broadcast %53 : vector<1x128xf32> to vector<8x128xf32>
    %57 = arith.addf %55, %56 : vector<8x128xf32>
    %cst_26 = arith.constant 0.000000e+00 : f32
    %58 = vector.broadcast %cst_26 : f32 to vector<8x128xf32>
    %59 = arith.subf %58, %57 : vector<8x128xf32>
    %60 = math.exp %59 : vector<8x128xf32>
    %cst_27 = arith.constant 1.000000e+00 : f32
    %61 = vector.broadcast %cst_27 : f32 to vector<8x128xf32>
    %62 = arith.addf %61, %60 : vector<8x128xf32>
    %63 = tpu.reciprocal %62 {approx = true} : vector<8x128xf32> -> vector<8x128xf32>
    %64 = arith.truncf %63 : vector<8x128xf32> to vector<8x128xbf16>
    %c0_28 = arith.constant 0 : index
    %c0_29 = arith.constant 0 : index
    %65 = vector.load %arg7[%c0_28, %c0_29] : memref<128x128xbf16, #tpu.memory_space<vmem>>, vector<128x128xbf16>
    %cst_30 = arith.constant dense<0.000000e+00> : vector<8x128xf32>
    %66 = tpu.matmul %64, %65, %cst_30 {dimension_numbers = #tpu.dot_dimension_numbers<[1], [0], [0], [1], [0, 0, 1, 1], [], []>} : vector<8x128xbf16>, vector<128x128xbf16>, vector<8x128xf32> -> vector<8x128xf32>
    %c0_31 = arith.constant 0 : index
    %c0_32 = arith.constant 0 : index
    %67 = vector.load %arg8[%c0_31, %c0_32] : memref<1x128xf32, #tpu.memory_space<vmem>>, vector<1x128xf32>
    %c0_33 = arith.constant 0 : index
    %c0_34 = arith.constant 0 : index
    %68 = vector.load %arg9[%c0_33, %c0_34] : memref<1x128xf32, #tpu.memory_space<vmem>>, vector<1x128xf32>
    %cst_35 = arith.constant dense<0.000000e+00> : vector<128xf32>
    %69 = vector.multi_reduction <add>, %66, %cst_35 [0] : vector<8x128xf32> to vector<128xf32>
    %70 = vector.shape_cast %69 : vector<128xf32> to vector<1x128xf32>
    %cst_36 = arith.constant 1.250000e-01 : f32
    %71 = vector.broadcast %cst_36 : f32 to vector<1x128xf32>
    %72 = arith.mulf %70, %71 : vector<1x128xf32>
    %73 = arith.mulf %66, %66 : vector<8x128xf32>
    %cst_37 = arith.constant dense<0.000000e+00> : vector<128xf32>
    %74 = vector.multi_reduction <add>, %73, %cst_37 [0] : vector<8x128xf32> to vector<128xf32>
    %75 = vector.shape_cast %74 : vector<128xf32> to vector<1x128xf32>
    %cst_38 = arith.constant 1.250000e-01 : f32
    %76 = vector.broadcast %cst_38 : f32 to vector<1x128xf32>
    %77 = arith.mulf %75, %76 : vector<1x128xf32>
    %78 = arith.mulf %72, %72 : vector<1x128xf32>
    %79 = arith.subf %77, %78 : vector<1x128xf32>
    %cst_39 = arith.constant 9.99999974E-6 : f32
    %80 = vector.broadcast %cst_39 : f32 to vector<1x128xf32>
    %81 = arith.addf %79, %80 : vector<1x128xf32>
    %82 = math.rsqrt %81 : vector<1x128xf32>
    %83 = arith.mulf %67, %82 : vector<1x128xf32>
    %84 = arith.mulf %72, %83 : vector<1x128xf32>
    %85 = arith.subf %68, %84 : vector<1x128xf32>
    %86 = vector.broadcast %83 : vector<1x128xf32> to vector<8x128xf32>
    %87 = arith.mulf %66, %86 : vector<8x128xf32>
    %88 = vector.broadcast %85 : vector<1x128xf32> to vector<8x128xf32>
    %89 = arith.addf %87, %88 : vector<8x128xf32>
    %cst_40 = arith.constant 0.000000e+00 : f32
    %90 = vector.broadcast %cst_40 : f32 to vector<8x128xf32>
    %91 = arith.subf %90, %89 : vector<8x128xf32>
    %92 = math.exp %91 : vector<8x128xf32>
    %cst_41 = arith.constant 1.000000e+00 : f32
    %93 = vector.broadcast %cst_41 : f32 to vector<8x128xf32>
    %94 = arith.addf %93, %92 : vector<8x128xf32>
    %95 = tpu.reciprocal %94 {approx = true} : vector<8x128xf32> -> vector<8x128xf32>
    %96 = arith.truncf %95 : vector<8x128xf32> to vector<8x128xbf16>
    %c0_42 = arith.constant 0 : index
    %c0_43 = arith.constant 0 : index
    %97 = vector.load %arg10[%c0_42, %c0_43] : memref<128x128xbf16, #tpu.memory_space<vmem>>, vector<128x128xbf16>
    %cst_44 = arith.constant dense<0.000000e+00> : vector<8x128xf32>
    %98 = tpu.matmul %96, %97, %cst_44 {dimension_numbers = #tpu.dot_dimension_numbers<[1], [0], [0], [1], [0, 0, 1, 1], [], []>} : vector<8x128xbf16>, vector<128x128xbf16>, vector<8x128xf32> -> vector<8x128xf32>
    %c0_45 = arith.constant 0 : index
    %c0_46 = arith.constant 0 : index
    %99 = vector.load %arg11[%c0_45, %c0_46] : memref<1x128xf32, #tpu.memory_space<vmem>>, vector<1x128xf32>
    %100 = vector.broadcast %99 : vector<1x128xf32> to vector<8x128xf32>
    %101 = arith.addf %98, %100 : vector<8x128xf32>
    %cst_47 = arith.constant 0.000000e+00 : f32
    %102 = vector.broadcast %cst_47 : f32 to vector<8x128xf32>
    %103 = arith.subf %102, %101 : vector<8x128xf32>
    %104 = math.exp %103 : vector<8x128xf32>
    %cst_48 = arith.constant 1.000000e+00 : f32
    %105 = vector.broadcast %cst_48 : f32 to vector<8x128xf32>
    %106 = arith.addf %105, %104 : vector<8x128xf32>
    %107 = tpu.reciprocal %106 {approx = true} : vector<8x128xf32> -> vector<8x128xf32>
    %c0_49 = arith.constant 0 : index
    %c0_50 = arith.constant 0 : index
    %108 = vector.load %arg12[%c0_49, %c0_50] : memref<8x128xf32, #tpu.memory_space<vmem>>, vector<8x128xf32>
    tpu.vector_store %arg12[%c0_49, %c0_50], %107 {strides = array<i32>} : memref<8x128xf32, #tpu.memory_space<vmem>>, vector<8x128xf32>,
    return
  }
}

</mosaic_0001>

<llo_original>
// kernel: tpu_custom_call.1
$region0: #{tpu_custom_call.1}
  #allocation0 [shape = 'u32[]', space=smem, size = 0x4, offset = 0x4, fixed_abs, tag = 'smem constant byte address 0x4 - core index']
  #allocation1 [shape = 'u32[144,128]{1,0:T(1,128)}', space=vmem, size = 0x12000, scoped, tag = 'internal scratch']
  %s0 = inlined_call_operand.hbm [shape: bf16[8,128], index: 0, kind: input, shape index: {}]
  %s1 = inlined_call_operand.hbm [shape: bf16[128,128], index: 1, kind: input, shape index: {}]
  %s2 = inlined_call_operand.vmem [shape: f32[1,128], index: 2, kind: input, shape index: {}]
  %s3 = inlined_call_operand.vmem [shape: f32[1,128], index: 3, kind: input, shape index: {}]
  %s4 = inlined_call_operand.hbm [shape: bf16[128,128], index: 4, kind: input, shape index: {}]
  %s5 = inlined_call_operand.vmem [shape: f32[1,128], index: 5, kind: input, shape index: {}]
  %s6 = inlined_call_operand.vmem [shape: f32[1,128], index: 6, kind: input, shape index: {}]
  %s7 = inlined_call_operand.hbm [shape: bf16[128,128], index: 7, kind: input, shape index: {}]
  %s8 = inlined_call_operand.vmem [shape: f32[1,128], index: 8, kind: input, shape index: {}]
  %s9 = inlined_call_operand.vmem [shape: f32[1,128], index: 9, kind: input, shape index: {}]
  %s10 = inlined_call_operand.hbm [shape: bf16[128,128], index: 10, kind: input, shape index: {}]
  %s11 = inlined_call_operand.vmem [shape: f32[1,128], index: 11, kind: input, shape index: {}]
  %s12 = inlined_call_operand.hbm [shape: f32[8,128], index: 12, kind: output, shape index: {}]
  %s13 = sld [smem:[#allocation0]]
  $region78: #{tpu_custom_call.1} parent=0
    _
  %s15 = ssub.s32 1, %s13
  %s16 = scalar_select 0, %s15, %s13
  $region1: #{tpu_custom_call.1} parent=0
    #allocation2 [shape = 'u8[2048]{0}', space=vmem, size = 0x800, scoped, tag = 'input window, operand 0, single buffered']
    #allocation3 [shape = 's32[1]{0}', space=sflag, size = 0x4, scoped, tag = 'scoped memory for tpu_custom_call.1']
    #allocation4 [shape = 's32[1]{0}', space=sflag, size = 0x4, scoped, tag = 'scoped memory for tpu_custom_call.1']
    #allocation5 [shape = 'u8[32768]{0}', space=vmem, size = 0x8000, scoped, tag = 'input window, operand 1, single buffered']
    #allocation6 [shape = 's32[1]{0}', space=sflag, size = 0x4, scoped, tag = 'scoped memory for tpu_custom_call.1']
    #allocation7 [shape = 'u8[32768]{0}', space=vmem, size = 0x8000, scoped, tag = 'input window, operand 4, single buffered']
    #allocation8 [shape = 'u8[32768]{0}', space=vmem, size = 0x8000, scoped, tag = 'input window, operand 7, single buffered']
    #allocation9 [shape = 's32[1]{0}', space=sflag, size = 0x4, scoped, tag = 'scoped memory for tpu_custom_call.1']
    #allocation10 [shape = 'u8[32768]{0}', space=vmem, size = 0x8000, scoped, tag = 'input window, operand 10, single buffered']
    #allocation11 [shape = 'u8[4096]{0}', space=vmem, size = 0x1000, scoped, tag = 'output window, operand 0, single buffered']
    %17 = vsyncpa [#allocation3], 0
    %18 = vsyncpa [#allocation6], 0
    %19 = vsyncpa [#allocation9], 0
    %20 = vsyncpa [#allocation4], 0
    // Predicated region
    $region2: #{tpu_custom_call.1} parent=1 // pred_check
      _
    $region3: #{tpu_custom_call.1} parent=1 // pred_check_branch
      %22 = sbr.rel (0) target = $region5
    $region4: #{tpu_custom_call.1} parent=1 // pred_region
      %s24 = ssub.s32 64, 64
      %25 = vsyncadd [#allocation3], %s24
      %s27 = sshll.u32 [#allocation2], 4
      %s28 = int_to_ptr.vmem [resolvable:$true] %s27
      %30 = dma.hbm_to_vmem [thread:$0]  %s0, 64, %s28, [#allocation3]
    $region5: #{tpu_custom_call.1} parent=1 // pred_fallthru
      _
    // Predicated region
    $region6: #{tpu_custom_call.1} parent=1 // pred_check
      _
    $region7: #{tpu_custom_call.1} parent=1 // pred_check_branch
      %32 = sbr.rel (0) target = $region9
    $region8: #{tpu_custom_call.1} parent=1 // pred_region
      %s34 = ssub.s32 1024, 1024
      %35 = vsyncadd [#allocation6], %s34
      %s36 = sshll.u32 [#allocation5], 4
      %s37 = int_to_ptr.vmem [resolvable:$true] %s36
      %42 = dma.hbm_to_vmem [thread:$0]  %s1, 1024, %s37, [#allocation6], 64, 64, 4
    $region9: #{tpu_custom_call.1} parent=1 // pred_fallthru
      _
    // Predicated region
    $region10: #{tpu_custom_call.1} parent=1 // pred_check
      _
    $region11: #{tpu_custom_call.1} parent=1 // pred_check_branch
      %44 = sbr.rel (0) target = $region13
    $region12: #{tpu_custom_call.1} parent=1 // pred_region
      _
    $region13: #{tpu_custom_call.1} parent=1 // pred_fallthru
      _
    // Predicated region
    $region14: #{tpu_custom_call.1} parent=1 // pred_check
      _
    $region15: #{tpu_custom_call.1} parent=1 // pred_check_branch
      %46 = sbr.rel (0) target = $region17
    $region16: #{tpu_custom_call.1} parent=1 // pred_region
      _
    $region17: #{tpu_custom_call.1} parent=1 // pred_fallthru
      _
    // Predicated region
    $region18: #{tpu_custom_call.1} parent=1 // pred_check
      _
    $region19: #{tpu_custom_call.1} parent=1 // pred_check_branch
      %48 = sbr.rel (0) target = $region21
    $region20: #{tpu_custom_call.1} parent=1 // pred_region
      %s50 = ssub.s32 1024, 1024
      %51 = vsyncadd [#allocation6], %s50
      %s52 = sshll.u32 [#allocation7], 4
      %s53 = int_to_ptr.vmem [resolvable:$true] %s52
      %58 = dma.hbm_to_vmem [thread:$0]  %s4, 1024, %s53, [#allocation6], 64, 64, 4
    $region21: #{tpu_custom_call.1} parent=1 // pred_fallthru
      _
    // Predicated region
    $region22: #{tpu_custom_call.1} parent=1 // pred_check
      _
    $region23: #{tpu_custom_call.1} parent=1 // pred_check_branch
      %60 = sbr.rel (0) target = $region25
    $region24: #{tpu_custom_call.1} parent=1 // pred_region
      _
    $region25: #{tpu_custom_call.1} parent=1 // pred_fallthru
      _
    // Predicated region
    $region26: #{tpu_custom_call.1} parent=1 // pred_check
      _
    $region27: #{tpu_custom_call.1} parent=1 // pred_check_branch
      %62 = sbr.rel (0) target = $region29
    $region28: #{tpu_custom_call.1} parent=1 // pred_region
      _
    $region29: #{tpu_custom_call.1} parent=1 // pred_fallthru
      _
    // Predicated region
    $region30: #{tpu_custom_call.1} parent=1 // pred_check
      _
    $region31: #{tpu_custom_call.1} parent=1 // pred_check_branch
      %64 = sbr.rel (0) target = $region33
    $region32: #{tpu_custom_call.1} parent=1 // pred_region
      %s66 = ssub.s32 1024, 1024
      %67 = vsyncadd [#allocation9], %s66
      %s68 = sshll.u32 [#allocation8], 4
      %s69 = int_to_ptr.vmem [resolvable:$true] %s68
      %74 = dma.hbm_to_vmem [thread:$0]  %s7, 1024, %s69, [#allocation9], 64, 64, 4
    $region33: #{tpu_custom_call.1} parent=1 // pred_fallthru
      _
    // Predicated region
    $region34: #{tpu_custom_call.1} parent=1 // pred_check
      _
    $region35: #{tpu_custom_call.1} parent=1 // pred_check_branch
      %76 = sbr.rel (0) target = $region37
    $region36: #{tpu_custom_call.1} parent=1 // pred_region
      _
    $region37: #{tpu_custom_call.1} parent=1 // pred_fallthru
      _
    // Predicated region
    $region38: #{tpu_custom_call.1} parent=1 // pred_check
      _
    $region39: #{tpu_custom_call.1} parent=1 // pred_check_branch
      %78 = sbr.rel (0) target = $region41
    $region40: #{tpu_custom_call.1} parent=1 // pred_region
      _
    $region41: #{tpu_custom_call.1} parent=1 // pred_fallthru
      _
    // Predicated region
    $region42: #{tpu_custom_call.1} parent=1 // pred_check
      _
    $region43: #{tpu_custom_call.1} parent=1 // pred_check_branch
      %80 = sbr.rel (0) target = $region45
    $region44: #{tpu_custom_call.1} parent=1 // pred_region
      %s82 = ssub.s32 1024, 1024
      %83 = vsyncadd [#allocation9], %s82
      %s84 = sshll.u32 [#allocation10], 4
      %s85 = int_to_ptr.vmem [resolvable:$true] %s84
      %90 = dma.hbm_to_vmem [thread:$0]  %s10, 1024, %s85, [#allocation9], 64, 64, 4
    $region45: #{tpu_custom_call.1} parent=1 // pred_fallthru
      _
    // Predicated region
    $region46: #{tpu_custom_call.1} parent=1 // pred_check
      _
    $region47: #{tpu_custom_call.1} parent=1 // pred_check_branch
      %92 = sbr.rel (0) target = $region49
    $region48: #{tpu_custom_call.1} parent=1 // pred_region
      _
    $region49: #{tpu_custom_call.1} parent=1 // pred_fallthru
      _
    // Predicated region
    $region50: #{tpu_custom_call.1} parent=1 // pred_check
      _
    $region51: #{tpu_custom_call.1} parent=1 // pred_check_branch
      %94 = sbr.rel (0) target = $region53
    $region52: #{tpu_custom_call.1} parent=1 // pred_region
      %95 = dma.done [#allocation3], 64
    $region53: #{tpu_custom_call.1} parent=1 // pred_fallthru
      _
    // Predicated region
    $region54: #{tpu_custom_call.1} parent=1 // pred_check
      _
    $region55: #{tpu_custom_call.1} parent=1 // pred_check_branch
      %97 = sbr.rel (0) target = $region57
    $region56: #{tpu_custom_call.1} parent=1 // pred_region
      %98 = dma.done [#allocation6], 1024
    $region57: #{tpu_custom_call.1} parent=1 // pred_fallthru
      _
    // Predicated region
    $region58: #{tpu_custom_call.1} parent=1 // pred_check
      _
    $region59: #{tpu_custom_call.1} parent=1 // pred_check_branch
      %100 = sbr.rel (0) target = $region61
    $region60: #{tpu_custom_call.1} parent=1 // pred_region
      %101 = dma.done [#allocation6], 1024
    $region61: #{tpu_custom_call.1} parent=1 // pred_fallthru
      _
    // Predicated region
    $region62: #{tpu_custom_call.1} parent=1 // pred_check
      _
    $region63: #{tpu_custom_call.1} parent=1 // pred_check_branch
      %103 = sbr.rel (0) target = $region65
    $region64: #{tpu_custom_call.1} parent=1 // pred_region
      %104 = dma.done [#allocation9], 1024
    $region65: #{tpu_custom_call.1} parent=1 // pred_fallthru
      _
    // Predicated region
    $region66: #{tpu_custom_call.1} parent=1 // pred_check
      _
    $region67: #{tpu_custom_call.1} parent=1 // pred_check_branch
      %106 = sbr.rel (0) target = $region69
    $region68: #{tpu_custom_call.1} parent=1 // pred_region
      %107 = dma.done [#allocation9], 1024
    $region69: #{tpu_custom_call.1} parent=1 // pred_fallthru
      _
    %v109 = vld [vmem:[#allocation2] sm:$0xf]
    %v110 = vld [vmem:[#allocation5] sm:$0xf]
    %v111 = vld [vmem:[#allocation5 + $0x4] sm:$0xf]
    %v112 = vld [vmem:[#allocation5 + $0x8] sm:$0xf]
    %v113 = vld [vmem:[#allocation5 + $0xc] sm:$0xf]
    %v114 = vld [vmem:[#allocation5 + $0x10] sm:$0xf]
    %v115 = vld [vmem:[#allocation5 + $0x14] sm:$0xf]
    %v116 = vld [vmem:[#allocation5 + $0x18] sm:$0xf]
    %v117 = vld [vmem:[#allocation5 + $0x1c] sm:$0xf]
    %v118 = vld [vmem:[#allocation5 + $0x20] sm:$0xf]
    %v119 = vld [vmem:[#allocation5 + $0x24] sm:$0xf]
    %v120 = vld [vmem:[#allocation5 + $0x28] sm:$0xf]
    %v121 = vld [vmem:[#allocation5 + $0x2c] sm:$0xf]
    %v122 = vld [vmem:[#allocation5 + $0x30] sm:$0xf]
    %v123 = vld [vmem:[#allocation5 + $0x34] sm:$0xf]
    %v124 = vld [vmem:[#allocation5 + $0x38] sm:$0xf]
    %v125 = vld [vmem:[#allocation5 + $0x3c] sm:$0xf]
    %v142 = vunpack.c.l.b16 %v110
    %v143 = vunpack.c.l.b16 %v111
    %v144 = vunpack.c.l.b16 %v112
    %v145 = vunpack.c.l.b16 %v113
    %v146 = vunpack.c.l.b16 %v114
    %v147 = vunpack.c.l.b16 %v115
    %v148 = vunpack.c.l.b16 %v116
    %v149 = vunpack.c.l.b16 %v117
    %v150 = vunpack.c.l.b16 %v118
    %v151 = vunpack.c.l.b16 %v119
    %v152 = vunpack.c.l.b16 %v120
    %v153 = vunpack.c.l.b16 %v121
    %v154 = vunpack.c.l.b16 %v122
    %v155 = vunpack.c.l.b16 %v123
    %v156 = vunpack.c.l.b16 %v124
    %v157 = vunpack.c.l.b16 %v125
    %v158 = vpack.c.b16 %v143, %v142
    %v159 = vpack.c.b16 %v145, %v144
    %v160 = vpack.c.b16 %v147, %v146
    %v161 = vpack.c.b16 %v149, %v148
    %v162 = vpack.c.b16 %v151, %v150
    %v163 = vpack.c.b16 %v153, %v152
    %v164 = vpack.c.b16 %v155, %v154
    %v165 = vpack.c.b16 %v157, %v156
    %174 = vmatprep.subr.bf16.mxu0 0
    %175 = vmatpush1.bf16.msra.mxu0 %v165
    %176 = vmatprep.subr.bf16.mxu0 0
    %177 = vmatpush1.bf16.msra.mxu0 %v164
    %178 = vmatprep.subr.bf16.mxu0 0
    %179 = vmatpush1.bf16.msra.mxu0 %v163
    %180 = vmatprep.subr.bf16.mxu0 0
    %181 = vmatpush1.bf16.msra.mxu0 %v162
    %182 = vmatprep.subr.bf16.mxu0 0
    %183 = vmatpush1.bf16.msra.mxu0 %v161
    %184 = vmatprep.subr.bf16.mxu0 0
    %185 = vmatpush1.bf16.msra.mxu0 %v160
    %186 = vmatprep.subr.bf16.mxu0 0
    %187 = vmatpush1.bf16.msra.mxu0 %v159
    %188 = vmatprep.subr.bf16.mxu0 0
    %189 = vmatpush1.bf16.msra.mxu0 %v158
    %190 = vmatprep.subr.bf16.mxu0 0
    %191 = vmatpush2.bf16.msra.mxu0 0
    %192 = vmatprep.subr.bf16.mxu0 0
    %193 = vmatpush2.bf16.msra.mxu0 0
    %194 = vmatprep.subr.bf16.mxu0 0
    %195 = vmatpush2.bf16.msra.mxu0 0
    %196 = vmatprep.subr.bf16.mxu0 0
    %197 = vmatpush2.bf16.msra.mxu0 0
    %198 = vmatprep.subr.bf16.mxu0 0
    %199 = vmatpush2.bf16.msra.mxu0 0
    %200 = vmatprep.subr.bf16.mxu0 0
    %201 = vmatpush2.bf16.msra.mxu0 0
    %202 = vmatprep.subr.bf16.mxu0 0
    %203 = vmatpush2.bf16.msra.mxu0 0
    %204 = vmatprep.subr.bf16.mxu0 0
    %205 = vmatpush2.bf16.msra.mxu0 0
    %206 = vmatprep.mubr.bf16.mxu0 0
    %207 = vmatmul.mubr.bf16.gmra.mxu0 %v109
    %v208 = vpop.f32.mrf.mxu0
    %v209 = vadd.f32 0.0, %v208
    %v210 = vpop.f32.mrf.mxu0
    %v211 = vpop.f32.mrf.mxu0
    %v212 = vpop.f32.mrf.mxu0
    %213 = vdwg.mxu0
    %v214 = vld [vmem:[%s2] sm:$0x1]
    %v215 = vld [vmem:[%s3] sm:$0x1]
    %v216 = vrot.slane %v209, 4
    %v217 = vadd.f32 %v209, %v216
    %v218 = vrot.slane %v217, 2
    %v219 = vadd.f32 %v217, %v218
    %v220 = vrot.slane %v219, 1
    %v221 = vadd.f32 %v219, %v220
    %v222 = vmul.f32 %v221, 0.125
    %v223 = vmul.f32 %v209, %v209
    %v224 = vrot.slane %v223, 4
    %v225 = vadd.f32 %v223, %v224
    %v226 = vrot.slane %v225, 2
    %v227 = vadd.f32 %v225, %v226
    %v228 = vrot.slane %v227, 1
    %v229 = vadd.f32 %v227, %v228
    %v230 = vmul.f32 %v229, 0.125
    %v231 = vmul.f32 %v222, %v222
    %v232 = vsub.f32 %v230, %v231
    %v233 = vadd.f32 %v232, 1e-05
    %v234 = vrsqrt.pop %v233
    %v235 = vmul.f32 %v214, %v234
    %v236 = vmul.f32 %v222, %v235
    %v237 = vsub.f32 %v215, %v236
    %v239 = vlaneseq
    %v240 = vshrl.u32 %v239, 7
    %v241 = vsub.s32 0, %v240
    %v242 = vrot.slane %v235, %v241
    %v244 = vmul.f32 %v209, %v242
    %v246 = vlaneseq
    %v247 = vshrl.u32 %v246, 7
    %v248 = vsub.s32 0, %v247
    %v249 = vrot.slane %v237, %v248
    %v251 = vadd.f32 %v244, %v249
    %v252 = vsub.f32 0.0, %v251
    %v253 = vmul.f32 %v252, 1.442695
    %v254 = vpow.pop %v253
    %v255 = vadd.f32 %v254, 1.0
    %v256 = vrcp.pop %v255
    %v257 = vpack.c.bf16 %v256, %v256
    %v258 = vld [vmem:[#allocation7] sm:$0xf]
    %v259 = vld [vmem:[#allocation7 + $0x4] sm:$0xf]
    %v260 = vld [vmem:[#allocation7 + $0x8] sm:$0xf]
    %v261 = vld [vmem:[#allocation7 + $0xc] sm:$0xf]
    %v262 = vld [vmem:[#allocation7 + $0x10] sm:$0xf]
    %v263 = vld [vmem:[#allocation7 + $0x14] sm:$0xf]
    %v264 = vld [vmem:[#allocation7 + $0x18] sm:$0xf]
    %v265 = vld [vmem:[#allocation7 + $0x1c] sm:$0xf]
    %v266 = vld [vmem:[#allocation7 + $0x20] sm:$0xf]
    %v267 = vld [vmem:[#allocation7 + $0x24] sm:$0xf]
    %v268 = vld [vmem:[#allocation7 + $0x28] sm:$0xf]
    %v269 = vld [vmem:[#allocation7 + $0x2c] sm:$0xf]
    %v270 = vld [vmem:[#allocation7 + $0x30] sm:$0xf]
    %v271 = vld [vmem:[#allocation7 + $0x34] sm:$0xf]
    %v272 = vld [vmem:[#allocation7 + $0x38] sm:$0xf]
    %v273 = vld [vmem:[#allocation7 + $0x3c] sm:$0xf]
    %v290 = vunpack.c.l.b16 %v258
    %v291 = vunpack.c.l.b16 %v259
    %v292 = vunpack.c.l.b16 %v260
    %v293 = vunpack.c.l.b16 %v261
    %v294 = vunpack.c.l.b16 %v262
    %v295 = vunpack.c.l.b16 %v263
    %v296 = vunpack.c.l.b16 %v264
    %v297 = vunpack.c.l.b16 %v265
    %v298 = vunpack.c.l.b16 %v266
    %v299 = vunpack.c.l.b16 %v267
    %v300 = vunpack.c.l.b16 %v268
    %v301 = vunpack.c.l.b16 %v269
    %v302 = vunpack.c.l.b16 %v270
    %v303 = vunpack.c.l.b16 %v271
    %v304 = vunpack.c.l.b16 %v272
    %v305 = vunpack.c.l.b16 %v273
    %v306 = vpack.c.b16 %v291, %v290
    %v307 = vpack.c.b16 %v293, %v292
    %v308 = vpack.c.b16 %v295, %v294
    %v309 = vpack.c.b16 %v297, %v296
    %v310 = vpack.c.b16 %v299, %v298
    %v311 = vpack.c.b16 %v301, %v300
    %v312 = vpack.c.b16 %v303, %v302
    %v313 = vpack.c.b16 %v305, %v304
    %322 = vmatprep.subr.bf16.mxu0 0
    %323 = vmatpush1.bf16.msra.mxu0 %v313
    %324 = vmatprep.subr.bf16.mxu0 0
    %325 = vmatpush1.bf16.msra.mxu0 %v312
    %326 = vmatprep.subr.bf16.mxu0 0
    %327 = vmatpush1.bf16.msra.mxu0 %v311
    %328 = vmatprep.subr.bf16.mxu0 0
    %329 = vmatpush1.bf16.msra.mxu0 %v310
    %330 = vmatprep.subr.bf16.mxu0 0
    %331 = vmatpush1.bf16.msra.mxu0 %v309
    %332 = vmatprep.subr.bf16.mxu0 0
    %333 = vmatpush1.bf16.msra.mxu0 %v308
    %334 = vmatprep.subr.bf16.mxu0 0
    %335 = vmatpush1.bf16.msra.mxu0 %v307
    %336 = vmatprep.subr.bf16.mxu0 0
    %337 = vmatpush1.bf16.msra.mxu0 %v306
    %338 = vmatprep.subr.bf16.mxu0 0
    %339 = vmatpush2.bf16.msra.mxu0 0
    %340 = vmatprep.subr.bf16.mxu0 0
    %341 = vmatpush2.bf16.msra.mxu0 0
    %342 = vmatprep.subr.bf16.mxu0 0
    %343 = vmatpush2.bf16.msra.mxu0 0
    %344 = vmatprep.subr.bf16.mxu0 0
    %345 = vmatpush2.bf16.msra.mxu0 0
    %346 = vmatprep.subr.bf16.mxu0 0
    %347 = vmatpush2.bf16.msra.mxu0 0
    %348 = vmatprep.subr.bf16.mxu0 0
    %349 = vmatpush2.bf16.msra.mxu0 0
    %350 = vmatprep.subr.bf16.mxu0 0
    %351 = vmatpush2.bf16.msra.mxu0 0
    %352 = vmatprep.subr.bf16.mxu0 0
    %353 = vmatpush2.bf16.msra.mxu0 0
    %354 = vmatprep.mubr.bf16.mxu0 0
    %355 = vmatmul.mubr.bf16.gmra.mxu0 %v257
    %v356 = vpop.f32.mrf.mxu0
    %v357 = vadd.f32 0.0, %v356
    %v358 = vpop.f32.mrf.mxu0
    %v359 = vpop.f32.mrf.mxu0
    %v360 = vpop.f32.mrf.mxu0
    %361 = vdwg.mxu0
    %v362 = vld [vmem:[%s5] sm:$0x1]
    %v363 = vld [vmem:[%s6] sm:$0x1]
    %v364 = vrot.slane %v357, 4
    %v365 = vadd.f32 %v357, %v364
    %v366 = vrot.slane %v365, 2
    %v367 = vadd.f32 %v365, %v366
    %v368 = vrot.slane %v367, 1
    %v369 = vadd.f32 %v367, %v368
    %v370 = vmul.f32 %v369, 0.125
    %v371 = vmul.f32 %v357, %v357
    %v372 = vrot.slane %v371, 4
    %v373 = vadd.f32 %v371, %v372
    %v374 = vrot.slane %v373, 2
    %v375 = vadd.f32 %v373, %v374
    %v376 = vrot.slane %v375, 1
    %v377 = vadd.f32 %v375, %v376
    %v378 = vmul.f32 %v377, 0.125
    %v379 = vmul.f32 %v370, %v370
    %v380 = vsub.f32 %v378, %v379
    %v381 = vadd.f32 %v380, 1e-05
    %v382 = vrsqrt.pop %v381
    %v383 = vmul.f32 %v362, %v382
    %v384 = vmul.f32 %v370, %v383
    %v385 = vsub.f32 %v363, %v384
    %v387 = vlaneseq
    %v388 = vshrl.u32 %v387, 7
    %v389 = vsub.s32 0, %v388
    %v390 = vrot.slane %v383, %v389
    %v392 = vmul.f32 %v357, %v390
    %v394 = vlaneseq
    %v395 = vshrl.u32 %v394, 7
    %v396 = vsub.s32 0, %v395
    %v397 = vrot.slane %v385, %v396
    %v399 = vadd.f32 %v392, %v397
    %v400 = vsub.f32 0.0, %v399
    %v401 = vmul.f32 %v400, 1.442695
    %v402 = vpow.pop %v401
    %v403 = vadd.f32 %v402, 1.0
    %v404 = vrcp.pop %v403
    %v405 = vpack.c.bf16 %v404, %v404
    %v406 = vld [vmem:[#allocation8] sm:$0xf]
    %v407 = vld [vmem:[#allocation8 + $0x4] sm:$0xf]
    %v408 = vld [vmem:[#allocation8 + $0x8] sm:$0xf]
    %v409 = vld [vmem:[#allocation8 + $0xc] sm:$0xf]
    %v410 = vld [vmem:[#allocation8 + $0x10] sm:$0xf]
    %v411 = vld [vmem:[#allocation8 + $0x14] sm:$0xf]
    %v412 = vld [vmem:[#allocation8 + $0x18] sm:$0xf]
    %v413 = vld [vmem:[#allocation8 + $0x1c] sm:$0xf]
    %v414 = vld [vmem:[#allocation8 + $0x20] sm:$0xf]
    %v415 = vld [vmem:[#allocation8 + $0x24] sm:$0xf]
    %v416 = vld [vmem:[#allocation8 + $0x28] sm:$0xf]
    %v417 = vld [vmem:[#allocation8 + $0x2c] sm:$0xf]
    %v418 = vld [vmem:[#allocation8 + $0x30] sm:$0xf]
    %v419 = vld [vmem:[#allocation8 + $0x34] sm:$0xf]
    %v420 = vld [vmem:[#allocation8 + $0x38] sm:$0xf]
    %v421 = vld [vmem:[#allocation8 + $0x3c] sm:$0xf]
    %v438 = vunpack.c.l.b16 %v406
    %v439 = vunpack.c.l.b16 %v407
    %v440 = vunpack.c.l.b16 %v408
    %v441 = vunpack.c.l.b16 %v409
    %v442 = vunpack.c.l.b16 %v410
    %v443 = vunpack.c.l.b16 %v411
    %v444 = vunpack.c.l.b16 %v412
    %v445 = vunpack.c.l.b16 %v413
    %v446 = vunpack.c.l.b16 %v414
    %v447 = vunpack.c.l.b16 %v415
    %v448 = vunpack.c.l.b16 %v416
    %v449 = vunpack.c.l.b16 %v417
    %v450 = vunpack.c.l.b16 %v418
    %v451 = vunpack.c.l.b16 %v419
    %v452 = vunpack.c.l.b16 %v420
    %v453 = vunpack.c.l.b16 %v421
    %v454 = vpack.c.b16 %v439, %v438
    %v455 = vpack.c.b16 %v441, %v440
    %v456 = vpack.c.b16 %v443, %v442
    %v457 = vpack.c.b16 %v445, %v444
    %v458 = vpack.c.b16 %v447, %v446
    %v459 = vpack.c.b16 %v449, %v448
    %v460 = vpack.c.b16 %v451, %v450
    %v461 = vpack.c.b16 %v453, %v452
    %470 = vmatprep.subr.bf16.mxu0 0
    %471 = vmatpush1.bf16.msra.mxu0 %v461
    %472 = vmatprep.subr.bf16.mxu0 0
    %473 = vmatpush1.bf16.msra.mxu0 %v460
    %474 = vmatprep.subr.bf16.mxu0 0
    %475 = vmatpush1.bf16.msra.mxu0 %v459
    %476 = vmatprep.subr.bf16.mxu0 0
    %477 = vmatpush1.bf16.msra.mxu0 %v458
    %478 = vmatprep.subr.bf16.mxu0 0
    %479 = vmatpush1.bf16.msra.mxu0 %v457
    %480 = vmatprep.subr.bf16.mxu0 0
    %481 = vmatpush1.bf16.msra.mxu0 %v456
    %482 = vmatprep.subr.bf16.mxu0 0
    %483 = vmatpush1.bf16.msra.mxu0 %v455
    %484 = vmatprep.subr.bf16.mxu0 0
    %485 = vmatpush1.bf16.msra.mxu0 %v454
    %486 = vmatprep.subr.bf16.mxu0 0
    %487 = vmatpush2.bf16.msra.mxu0 0
    %488 = vmatprep.subr.bf16.mxu0 0
    %489 = vmatpush2.bf16.msra.mxu0 0
    %490 = vmatprep.subr.bf16.mxu0 0
    %491 = vmatpush2.bf16.msra.mxu0 0
    %492 = vmatprep.subr.bf16.mxu0 0
    %493 = vmatpush2.bf16.msra.mxu0 0
    %494 = vmatprep.subr.bf16.mxu0 0
    %495 = vmatpush2.bf16.msra.mxu0 0
    %496 = vmatprep.subr.bf16.mxu0 0
    %497 = vmatpush2.bf16.msra.mxu0 0
    %498 = vmatprep.subr.bf16.mxu0 0
    %499 = vmatpush2.bf16.msra.mxu0 0
    %500 = vmatprep.subr.bf16.mxu0 0
    %501 = vmatpush2.bf16.msra.mxu0 0
    %502 = vmatprep.mubr.bf16.mxu0 0
    %503 = vmatmul.mubr.bf16.gmra.mxu0 %v405
    %v504 = vpop.f32.mrf.mxu0
    %v505 = vadd.f32 0.0, %v504
    %v506 = vpop.f32.mrf.mxu0
    %v507 = vpop.f32.mrf.mxu0
    %v508 = vpop.f32.mrf.mxu0
    %509 = vdwg.mxu0
    %v510 = vld [vmem:[%s8] sm:$0x1]
    %v511 = vld [vmem:[%s9] sm:$0x1]
    %v512 = vrot.slane %v505, 4
    %v513 = vadd.f32 %v505, %v512
    %v514 = vrot.slane %v513, 2
    %v515 = vadd.f32 %v513, %v514
    %v516 = vrot.slane %v515, 1
    %v517 = vadd.f32 %v515, %v516
    %v518 = vmul.f32 %v517, 0.125
    %v519 = vmul.f32 %v505, %v505
    %v520 = vrot.slane %v519, 4
    %v521 = vadd.f32 %v519, %v520
    %v522 = vrot.slane %v521, 2
    %v523 = vadd.f32 %v521, %v522
    %v524 = vrot.slane %v523, 1
    %v525 = vadd.f32 %v523, %v524
    %v526 = vmul.f32 %v525, 0.125
    %v527 = vmul.f32 %v518, %v518
    %v528 = vsub.f32 %v526, %v527
    %v529 = vadd.f32 %v528, 1e-05
    %v530 = vrsqrt.pop %v529
    %v531 = vmul.f32 %v510, %v530
    %v532 = vmul.f32 %v518, %v531
    %v533 = vsub.f32 %v511, %v532
    %v535 = vlaneseq
    %v536 = vshrl.u32 %v535, 7
    %v537 = vsub.s32 0, %v536
    %v538 = vrot.slane %v531, %v537
    %v540 = vmul.f32 %v505, %v538
    %v542 = vlaneseq
    %v543 = vshrl.u32 %v542, 7
    %v544 = vsub.s32 0, %v543
    %v545 = vrot.slane %v533, %v544
    %v547 = vadd.f32 %v540, %v545
    %v548 = vsub.f32 0.0, %v547
    %v549 = vmul.f32 %v548, 1.442695
    %v550 = vpow.pop %v549
    %v551 = vadd.f32 %v550, 1.0
    %v552 = vrcp.pop %v551
    %v553 = vpack.c.bf16 %v552, %v552
    %v554 = vld [vmem:[#allocation10] sm:$0xf]
    %v555 = vld [vmem:[#allocation10 + $0x4] sm:$0xf]
    %v556 = vld [vmem:[#allocation10 + $0x8] sm:$0xf]
    %v557 = vld [vmem:[#allocation10 + $0xc] sm:$0xf]
    %v558 = vld [vmem:[#allocation10 + $0x10] sm:$0xf]
    %v559 = vld [vmem:[#allocation10 + $0x14] sm:$0xf]
    %v560 = vld [vmem:[#allocation10 + $0x18] sm:$0xf]
    %v561 = vld [vmem:[#allocation10 + $0x1c] sm:$0xf]
    %v562 = vld [vmem:[#allocation10 + $0x20] sm:$0xf]
    %v563 = vld [vmem:[#allocation10 + $0x24] sm:$0xf]
    %v564 = vld [vmem:[#allocation10 + $0x28] sm:$0xf]
    %v565 = vld [vmem:[#allocation10 + $0x2c] sm:$0xf]
    %v566 = vld [vmem:[#allocation10 + $0x30] sm:$0xf]
    %v567 = vld [vmem:[#allocation10 + $0x34] sm:$0xf]
    %v568 = vld [vmem:[#allocation10 + $0x38] sm:$0xf]
    %v569 = vld [vmem:[#allocation10 + $0x3c] sm:$0xf]
    %v570 = vld [vmem:[%s11] sm:$0x1]
    %v572 = vlaneseq
    %v573 = vshrl.u32 %v572, 7
    %v574 = vsub.s32 0, %v573
    %v575 = vrot.slane %v570, %v574
    %v593 = vunpack.c.l.b16 %v554
    %v594 = vunpack.c.l.b16 %v555
    %v595 = vunpack.c.l.b16 %v556
    %v596 = vunpack.c.l.b16 %v557
    %v597 = vunpack.c.l.b16 %v558
    %v598 = vunpack.c.l.b16 %v559
    %v599 = vunpack.c.l.b16 %v560
    %v600 = vunpack.c.l.b16 %v561
    %v601 = vunpack.c.l.b16 %v562
    %v602 = vunpack.c.l.b16 %v563
    %v603 = vunpack.c.l.b16 %v564
    %v604 = vunpack.c.l.b16 %v565
    %v605 = vunpack.c.l.b16 %v566
    %v606 = vunpack.c.l.b16 %v567
    %v607 = vunpack.c.l.b16 %v568
    %v608 = vunpack.c.l.b16 %v569
    %v609 = vpack.c.b16 %v594, %v593
    %v610 = vpack.c.b16 %v596, %v595
    %v611 = vpack.c.b16 %v598, %v597
    %v612 = vpack.c.b16 %v600, %v599
    %v613 = vpack.c.b16 %v602, %v601
    %v614 = vpack.c.b16 %v604, %v603
    %v615 = vpack.c.b16 %v606, %v605
    %v616 = vpack.c.b16 %v608, %v607
    %625 = vmatprep.subr.bf16.mxu0 0
    %626 = vmatpush1.bf16.msra.mxu0 %v616
    %627 = vmatprep.subr.bf16.mxu0 0
    %628 = vmatpush1.bf16.msra.mxu0 %v615
    %629 = vmatprep.subr.bf16.mxu0 0
    %630 = vmatpush1.bf16.msra.mxu0 %v614
    %631 = vmatprep.subr.bf16.mxu0 0
    %632 = vmatpush1.bf16.msra.mxu0 %v613
    %633 = vmatprep.subr.bf16.mxu0 0
    %634 = vmatpush1.bf16.msra.mxu0 %v612
    %635 = vmatprep.subr.bf16.mxu0 0
    %636 = vmatpush1.bf16.msra.mxu0 %v611
    %637 = vmatprep.subr.bf16.mxu0 0
    %638 = vmatpush1.bf16.msra.mxu0 %v610
    %639 = vmatprep.subr.bf16.mxu0 0
    %640 = vmatpush1.bf16.msra.mxu0 %v609
    %641 = vmatprep.subr.bf16.mxu0 0
    %642 = vmatpush2.bf16.msra.mxu0 0
    %643 = vmatprep.subr.bf16.mxu0 0
    %644 = vmatpush2.bf16.msra.mxu0 0
    %645 = vmatprep.subr.bf16.mxu0 0
    %646 = vmatpush2.bf16.msra.mxu0 0
    %647 = vmatprep.subr.bf16.mxu0 0
    %648 = vmatpush2.bf16.msra.mxu0 0
    %649 = vmatprep.subr.bf16.mxu0 0
    %650 = vmatpush2.bf16.msra.mxu0 0
    %651 = vmatprep.subr.bf16.mxu0 0
    %652 = vmatpush2.bf16.msra.mxu0 0
    %653 = vmatprep.subr.bf16.mxu0 0
    %654 = vmatpush2.bf16.msra.mxu0 0
    %655 = vmatprep.subr.bf16.mxu0 0
    %656 = vmatpush2.bf16.msra.mxu0 0
    %657 = vmatprep.mubr.bf16.mxu0 0
    %658 = vmatmul.mubr.bf16.gmra.mxu0 %v553
    %v659 = vpop.f32.mrf.mxu0
    %v660 = vadd.f32 %v575, %v659
    %v661 = vpop.f32.mrf.mxu0
    %v662 = vpop.f32.mrf.mxu0
    %v663 = vpop.f32.mrf.mxu0
    %664 = vdwg.mxu0
    %v665 = vsub.f32 0.0, %v660
    %v666 = vmul.f32 %v665, 1.442695
    %v667 = vpow.pop %v666
    %v668 = vadd.f32 %v667, 1.0
    %v669 = vrcp.pop %v668
    %670 = vst [vmem:[#allocation11] sm:$0xff] %v669
    // Predicated region
    $region70: #{tpu_custom_call.1} parent=1 // pred_check
      _
    $region71: #{tpu_custom_call.1} parent=1 // pred_check_branch
      %672 = sbr.rel (0) target = $region73
    $region72: #{tpu_custom_call.1} parent=1 // pred_region
      %s674 = ssub.s32 128, 128
      %675 = vsyncadd [#allocation4], %s674
      %s677 = sshll.u32 [#allocation11], 4
      %s678 = int_to_ptr.vmem [resolvable:$true] %s677
      %680 = dma.vmem_to_hbm [thread:$0]  %s678, 128, %s12, [#allocation4]
    $region73: #{tpu_custom_call.1} parent=1 // pred_fallthru
      _
    // Predicated region
    $region74: #{tpu_custom_call.1} parent=1 // pred_check
      _
    $region75: #{tpu_custom_call.1} parent=1 // pred_check_branch
      %682 = sbr.rel (0) target = $region77
    $region76: #{tpu_custom_call.1} parent=1 // pred_region
      %683 = dma.done [#allocation4], 128
    $region77: #{tpu_custom_call.1} parent=1 // pred_fallthru
      _
    %684 = vsyncpa [#allocation3], 1
    %685 = vsyncpa [#allocation6], 1
    %686 = vsyncpa [#allocation9], 1
    %687 = vsyncpa [#allocation4], 1

</llo_original>
